<compile_context>
chip_gen: v5e
topology: v5e:2x2
jax: 0.10.0
libtpu: 0.0.40
codegen_flags: <defaults>
</compile_context>

<pallas_src>
import jax
import jax.numpy as jnp
from jax.experimental import pallas as pl
from jax.experimental.pallas import tpu as pltpu

_SUBLANE = 8


def _round_up(n, m):
    return ((n + m - 1) // m) * m


def _choose_block_m(batch, block_m):
    """Pick the batch tile: big (amortize per-step overhead), multiple of 8,
    and guaranteeing >= 2 grid steps once the batch can fill 2 tiles so the
    v7x megacore actually engages both TensorCores."""
    block_m = max(_SUBLANE, (block_m // _SUBLANE) * _SUBLANE)
    if batch <= 2 * _SUBLANE:
        return batch  # single exact tile; block dims == full array dims
    bm = _round_up(pl.cdiv(batch, 2), _SUBLANE)  # <= half the batch -> >=2 steps
    return max(_SUBLANE, min(block_m, bm))


def _dqn_forward_kernel(x_ref, w1_ref, b1_ref, w2_ref, b2_ref, w3_ref, b3_ref,
                        out_ref):
    """Fused forward: 3 MXU matmuls (bf16 operands, f32 accum) + f32 bias/ReLU."""
    # x arrives in native f32; cast to bf16 here (VPU op, hidden under the DMA).
    x = x_ref[...].astype(jnp.bfloat16)                            # (BM, in)

    # dense1 + relu (f32 accum / f32 elementwise)
    h1 = jnp.dot(x, w1_ref[...], preferred_element_type=jnp.float32)
    h1 = jnp.maximum(h1 + b1_ref[...], 0.0)

    # dense2 + relu
    h2 = jnp.dot(h1.astype(jnp.bfloat16), w2_ref[...],
                 preferred_element_type=jnp.float32)
    h2 = jnp.maximum(h2 + b2_ref[...], 0.0)

    # dense3 (no activation); output block spans the full (narrow) feature dim,
    # so the HBM writeback is a contiguous 16 B/row stream.
    y = jnp.dot(h2.astype(jnp.bfloat16), w3_ref[...],
                preferred_element_type=jnp.float32)
    out_ref[...] = (y + b3_ref[...]).astype(out_ref.dtype)


def dqn_forward(x, w1, b1, w2, b2, w3, b3, *, block_m=1024):
    """Pallas wrapper: batch-tiled grid, resident weights, no wrapper-side
    pad/cast/slice passes on the activations."""
    batch, in_size = x.shape
    l1 = w1.shape[1]
    l2 = w2.shape[1]
    out_size = w3.shape[1]

    bm = _choose_block_m(batch, block_m)
    grid = (pl.cdiv(batch, bm),)   # ragged last tile handled by Pallas masking

    # One-time (tiny) bf16 cast of the weights only; x stays f32 in HBM.
    w1_bf = w1.astype(jnp.bfloat16)
    w2_bf = w2.astype(jnp.bfloat16)
    w3_bf = w3.astype(jnp.bfloat16)

    def resident(a):
        nd = a.ndim
        return pl.BlockSpec(a.shape, lambda i, _nd=nd: (0,) * _nd)

    cost = pl.CostEstimate(
        flops=2 * batch * (in_size * l1 + l1 * l2 + l2 * out_size),
        transcendentals=0,
        bytes_accessed=(x.size * 4
                        + (w1_bf.size + w2_bf.size + w3_bf.size) * 2
                        + (b1.size + b2.size + b3.size) * 4
                        + batch * out_size * 4),
    )

    return pl.pallas_call(
        _dqn_forward_kernel,
        out_shape=jax.ShapeDtypeStruct((batch, out_size), jnp.float32),
        grid=grid,
        in_specs=[
            pl.BlockSpec((bm, in_size), lambda i: (i, 0)),   # streamed f32 x tiles
            resident(w1_bf), resident(b1),                   # weights stay in VMEM
            resident(w2_bf), resident(b2),
            resident(w3_bf), resident(b3),
        ],
        out_specs=pl.BlockSpec((bm, out_size), lambda i: (i, 0)),
        compiler_params=pltpu.CompilerParams(
            dimension_semantics=("parallel",),   # megacore sharding on v7x
            vmem_limit_bytes=32 * 1024 * 1024),  # headroom vs v5e 16 MiB default
        cost_estimate=cost,
    )(x, w1_bf, b1, w2_bf, b2, w3_bf, b3)


def init_dqn_params(key, input_size, layer1, layer2, output_size):
    """Deterministic init mimicking torch.nn.Linear (uniform +/- 1/sqrt(fan_in)).
    Weights stored as (in_features, out_features)."""
    ks = jax.random.split(key, 6)

    def linear(kw, kb, fan_in, fan_out):
        bound = 1.0 / jnp.sqrt(fan_in)
        w = jax.random.uniform(kw, (fan_in, fan_out), jnp.float32, -bound, bound)
        b = jax.random.uniform(kb, (1, fan_out), jnp.float32, -bound, bound)
        return w, b

    w1, b1 = linear(ks[0], ks[1], input_size, layer1)
    w2, b2 = linear(ks[2], ks[3], layer1, layer2)
    w3, b3 = linear(ks[4], ks[5], layer2, output_size)
    return w1, b1, w2, b2, w3, b3


if __name__ == "__main__":
    # Small, config-like sizes (layer1/layer2 come from a config file in the
    # original module; chosen deterministically here).  batch=40 deliberately
    # exercises a 2-step grid with a ragged (masked) last tile.
    batch = 40
    input_size = 16
    layer1 = 64
    layer2 = 32
    output_size = 4

    # TODO(synk): Adam optimizer + saveModel/loadModel (torch.save/load) are
    # training/IO utilities, not part of the forward pass; not implemented here.

    key = jax.random.PRNGKey(0)
    k_x, k_p = jax.random.split(key)

    x = jax.random.normal(k_x, (batch, input_size), jnp.float32)
    params = init_dqn_params(k_p, input_size, layer1, layer2, output_size)

    out = dqn_forward(x, *params)
    out = jax.block_until_ready(out)
    assert out.shape == (batch, output_size)

    w1, b1, w2, b2, w3, b3 = params

    # Reference matched to the kernel's numerics (bf16 operands, f32 accum).
    xb = x.astype(jnp.bfloat16)
    ref = jnp.maximum(
        jnp.dot(xb, w1.astype(jnp.bfloat16),
                preferred_element_type=jnp.float32) + b1, 0.0)
    ref = jnp.maximum(
        jnp.dot(ref.astype(jnp.bfloat16), w2.astype(jnp.bfloat16),
                preferred_element_type=jnp.float32) + b2, 0.0)
    ref = jnp.dot(ref.astype(jnp.bfloat16), w3.astype(jnp.bfloat16),
                  preferred_element_type=jnp.float32) + b3
    assert jnp.allclose(out, ref, atol=1e-3, rtol=1e-3)

    # Loose sanity check against the full-f32 forward (bf16 operand rounding).
    ref32 = jnp.maximum(x @ w1 + b1, 0.0)
    ref32 = jnp.maximum(ref32 @ w2 + b2, 0.0)
    ref32 = ref32 @ w3 + b3
    assert jnp.allclose(out, ref32, atol=5e-2, rtol=5e-2)

    print("KERNEL_OK")
</pallas_src>

<mosaic_0001>
module attributes {stable_mosaic.version = 11 : i64} {
  func.func @_dqn_forward_kernel(%arg0: i32, %arg1: memref<24x16xf32, #tpu.memory_space<vmem>>, %arg2: memref<16x64xbf16, #tpu.memory_space<vmem>>, %arg3: memref<1x64xf32, #tpu.memory_space<vmem>>, %arg4: memref<64x32xbf16, #tpu.memory_space<vmem>>, %arg5: memref<1x32xf32, #tpu.memory_space<vmem>>, %arg6: memref<32x4xbf16, #tpu.memory_space<vmem>>, %arg7: memref<1x4xf32, #tpu.memory_space<vmem>>, %arg8: memref<24x4xf32, #tpu.memory_space<vmem>>) attributes {dimension_semantics = [#tpu.dimension_semantics<parallel>], iteration_bounds = array<i64: 2>, scalar_prefetch = 0 : i64, scratch_operands = 0 : i64, tpu.core_type = #tpu.core_type<tc>, window_params = [{transform_indices = @transform_0, window_bounds = array<i64: 24, 16>}, {pipeline_mode = #tpu.pipeline_mode<synchronous>, transform_indices = @transform_1, window_bounds = array<i64: 16, 64>}, {pipeline_mode = #tpu.pipeline_mode<synchronous>, transform_indices = @transform_2, window_bounds = array<i64: 1, 64>}, {pipeline_mode = #tpu.pipeline_mode<synchronous>, transform_indices = @transform_3, window_bounds = array<i64: 64, 32>}, {pipeline_mode = #tpu.pipeline_mode<synchronous>, transform_indices = @transform_4, window_bounds = array<i64: 1, 32>}, {pipeline_mode = #tpu.pipeline_mode<synchronous>, transform_indices = @transform_5, window_bounds = array<i64: 32, 4>}, {pipeline_mode = #tpu.pipeline_mode<synchronous>, transform_indices = @transform_6, window_bounds = array<i64: 1, 4>}, {transform_indices = @transform_7, window_bounds = array<i64: 24, 4>}]} {
    %c0 = arith.constant 0 : index
    %c0_0 = arith.constant 0 : index
    %0 = vector.load %arg1[%c0, %c0_0] : memref<24x16xf32, #tpu.memory_space<vmem>>, vector<24x16xf32>
    %1 = arith.truncf %0 : vector<24x16xf32> to vector<24x16xbf16>
    %c0_1 = arith.constant 0 : index
    %c0_2 = arith.constant 0 : index
    %2 = vector.load %arg2[%c0_1, %c0_2] : memref<16x64xbf16, #tpu.memory_space<vmem>>, vector<16x64xbf16>
    %cst = arith.constant dense<0.000000e+00> : vector<24x64xf32>
    %3 = tpu.matmul %1, %2, %cst {dimension_numbers = #tpu.dot_dimension_numbers<[1], [0], [0], [1], [0, 0, 1, 1], [], []>} : vector<24x16xbf16>, vector<16x64xbf16>, vector<24x64xf32> -> vector<24x64xf32>
    %c0_3 = arith.constant 0 : index
    %c0_4 = arith.constant 0 : index
    %4 = vector.load %arg3[%c0_3, %c0_4] : memref<1x64xf32, #tpu.memory_space<vmem>>, vector<1x64xf32>
    %5 = vector.broadcast %4 : vector<1x64xf32> to vector<24x64xf32>
    %6 = arith.addf %3, %5 : vector<24x64xf32>
    %cst_5 = arith.constant 0.000000e+00 : f32
    %7 = vector.broadcast %cst_5 : f32 to vector<24x64xf32>
    %8 = arith.maximumf %6, %7 : vector<24x64xf32>
    %9 = arith.truncf %8 : vector<24x64xf32> to vector<24x64xbf16>
    %c0_6 = arith.constant 0 : index
    %c0_7 = arith.constant 0 : index
    %10 = vector.load %arg4[%c0_6, %c0_7] : memref<64x32xbf16, #tpu.memory_space<vmem>>, vector<64x32xbf16>
    %cst_8 = arith.constant dense<0.000000e+00> : vector<24x32xf32>
    %11 = tpu.matmul %9, %10, %cst_8 {dimension_numbers = #tpu.dot_dimension_numbers<[1], [0], [0], [1], [0, 0, 1, 1], [], []>} : vector<24x64xbf16>, vector<64x32xbf16>, vector<24x32xf32> -> vector<24x32xf32>
    %c0_9 = arith.constant 0 : index
    %c0_10 = arith.constant 0 : index
    %12 = vector.load %arg5[%c0_9, %c0_10] : memref<1x32xf32, #tpu.memory_space<vmem>>, vector<1x32xf32>
    %13 = vector.broadcast %12 : vector<1x32xf32> to vector<24x32xf32>
    %14 = arith.addf %11, %13 : vector<24x32xf32>
    %cst_11 = arith.constant 0.000000e+00 : f32
    %15 = vector.broadcast %cst_11 : f32 to vector<24x32xf32>
    %16 = arith.maximumf %14, %15 : vector<24x32xf32>
    %17 = arith.truncf %16 : vector<24x32xf32> to vector<24x32xbf16>
    %c0_12 = arith.constant 0 : index
    %c0_13 = arith.constant 0 : index
    %18 = vector.load %arg6[%c0_12, %c0_13] : memref<32x4xbf16, #tpu.memory_space<vmem>>, vector<32x4xbf16>
    %cst_14 = arith.constant dense<0.000000e+00> : vector<24x4xf32>
    %19 = tpu.matmul %17, %18, %cst_14 {dimension_numbers = #tpu.dot_dimension_numbers<[1], [0], [0], [1], [0, 0, 1, 1], [], []>} : vector<24x32xbf16>, vector<32x4xbf16>, vector<24x4xf32> -> vector<24x4xf32>
    %c0_15 = arith.constant 0 : index
    %c0_16 = arith.constant 0 : index
    %20 = vector.load %arg7[%c0_15, %c0_16] : memref<1x4xf32, #tpu.memory_space<vmem>>, vector<1x4xf32>
    %21 = vector.broadcast %20 : vector<1x4xf32> to vector<24x4xf32>
    %22 = arith.addf %19, %21 : vector<24x4xf32>
    %c0_17 = arith.constant 0 : index
    %c0_18 = arith.constant 0 : index
    %23 = vector.load %arg8[%c0_17, %c0_18] : memref<24x4xf32, #tpu.memory_space<vmem>>, vector<24x4xf32>
    tpu.vector_store %arg8[%c0_17, %c0_18], %22 {strides = array<i32>} : memref<24x4xf32, #tpu.memory_space<vmem>>, vector<24x4xf32>,
    return
  }
  func.func @transform_0(%arg0: i32) -> (i32, i32) {
    %c0_i32 = arith.constant 0 : i32
    %c0_i32_0 = arith.constant 0 : i32
    return %arg0, %c0_i32 : i32, i32
  }
  func.func @transform_1(%arg0: i32) -> (i32, i32) {
    %c0_i32 = arith.constant 0 : i32
    %c0_i32_0 = arith.constant 0 : i32
    %c0_i32_1 = arith.constant 0 : i32
    return %c0_i32, %c0_i32_0 : i32, i32
  }
  func.func @transform_2(%arg0: i32) -> (i32, i32) {
    %c0_i32 = arith.constant 0 : i32
    %c0_i32_0 = arith.constant 0 : i32
    %c0_i32_1 = arith.constant 0 : i32
    return %c0_i32, %c0_i32_0 : i32, i32
  }
  func.func @transform_3(%arg0: i32) -> (i32, i32) {
    %c0_i32 = arith.constant 0 : i32
    %c0_i32_0 = arith.constant 0 : i32
    %c0_i32_1 = arith.constant 0 : i32
    return %c0_i32, %c0_i32_0 : i32, i32
  }
  func.func @transform_4(%arg0: i32) -> (i32, i32) {
    %c0_i32 = arith.constant 0 : i32
    %c0_i32_0 = arith.constant 0 : i32
    %c0_i32_1 = arith.constant 0 : i32
    return %c0_i32, %c0_i32_0 : i32, i32
  }
  func.func @transform_5(%arg0: i32) -> (i32, i32) {
    %c0_i32 = arith.constant 0 : i32
    %c0_i32_0 = arith.constant 0 : i32
    %c0_i32_1 = arith.constant 0 : i32
    return %c0_i32, %c0_i32_0 : i32, i32
  }
  func.func @transform_6(%arg0: i32) -> (i32, i32) {
    %c0_i32 = arith.constant 0 : i32
    %c0_i32_0 = arith.constant 0 : i32
    %c0_i32_1 = arith.constant 0 : i32
    return %c0_i32, %c0_i32_0 : i32, i32
  }
  func.func @transform_7(%arg0: i32) -> (i32, i32) {
    %c0_i32 = arith.constant 0 : i32
    %c0_i32_0 = arith.constant 0 : i32
    return %arg0, %c0_i32 : i32, i32
  }
}

</mosaic_0001>

<llo_original>
// kernel: tpu_custom_call.1
$region0: #{tpu_custom_call.1}
  #allocation0 [shape = 'u32[]', space=smem, size = 0x4, offset = 0x4, fixed_abs, tag = 'smem constant byte address 0x4 - core index']
  #allocation1 [shape = 'u32[72,128]{1,0:T(1,128)}', space=vmem, size = 0x9000, scoped, tag = 'internal scratch']
  %s0 = inlined_call_operand.vmem [shape: f32[40,16], index: 0, kind: input, shape index: {}]
  %s1 = inlined_call_operand.vmem [shape: bf16[16,64], index: 1, kind: input, shape index: {}]
  %s2 = inlined_call_operand.vmem [shape: f32[1,64], index: 2, kind: input, shape index: {}]
  %s3 = inlined_call_operand.vmem [shape: bf16[64,32], index: 3, kind: input, shape index: {}]
  %s4 = inlined_call_operand.vmem [shape: f32[1,32], index: 4, kind: input, shape index: {}]
  %s5 = inlined_call_operand.vmem [shape: bf16[32,4], index: 5, kind: input, shape index: {}]
  %s6 = inlined_call_operand.vmem [shape: f32[1,4], index: 6, kind: input, shape index: {}]
  %s7 = inlined_call_operand.vmem [shape: f32[40,4], index: 7, kind: output, shape index: {}]
  %s8 = sld [smem:[#allocation0]]
  $region109: #{tpu_custom_call.1} parent=0
    _
  %s10 = ssub.s32 1, %s8
  %s11 = scalar_select 0, %s10, %s8
  $region1: #{tpu_custom_call.1} parent=0
    #allocation2 [shape = 'u8[24576]{0}', space=vmem, size = 0x6000, scoped, tag = 'output window, operand 0']
    loop: start=0, step=1, limit=4
    $region2: #{tpu_custom_call.1} parent=1 // loop_pre_header
      _
    $region3: #{tpu_custom_call.1} parent=1 // loop_header
      %s13 = sphi 0, %s17
      %p14 = scmp.ge.s32.totalorder %s13, 4
      %s23 = sphi 0, %s25
      %s26 = sphi 0, %s23
      %s27 = sphi 0, %s26
      %s43 = sphi 0, %s27
      %s47 = sphi 0, %s47
      %s49 = sphi 0, %s47
      %s50 = sphi 0, %s49
      %s64 = sphi 0, %s50
      %s68 = sphi 0, %s68
      %s70 = sphi 0, %s68
      %s71 = sphi 0, %s70
      %s85 = sphi 0, %s71
      %s89 = sphi 0, %s89
      %s91 = sphi 0, %s89
      %s92 = sphi 0, %s91
      %s106 = sphi 0, %s92
      %s110 = sphi 0, %s110
      %s112 = sphi 0, %s110
      %s113 = sphi 0, %s112
      %s127 = sphi 0, %s113
      %s131 = sphi 0, %s131
      %s133 = sphi 0, %s131
      %s134 = sphi 0, %s133
      %s148 = sphi 0, %s134
      %s152 = sphi 0, %s152
      %s154 = sphi 0, %s152
      %s155 = sphi 0, %s154
      %s169 = sphi 0, %s155
      %s175 = sphi 0, %s177
      %s178 = sphi 0, %s175
      %s179 = sphi 0, %s178
      %s195 = sphi 0, %s179
    $region4: #{tpu_custom_call.1} parent=1 // loop_header_branch
      %16 = sbr.rel (%p14) target = $region8
    $region5: #{tpu_custom_call.1} parent=1 // loop_body
      %s18 = ssub.s32 %s13, 1
      %s19 = ssub.s32 %s13, 2
      %s20 = sadd.s32 %s13, 1
      %s21 = ssub.s32 %s13, %s20
      %p22 = scmp.eq.s32.totalorder %s21, 0
      %s24 = sadd.s32 %s23, 1
      %s25 = scalar_select %p22, %s23, %s24
      %p28 = pneg %p22
      %p29 = scmp.eq.s32.totalorder %s13, 1
      %p30 = por %p28, %p29
      %p31 = scmp.ne.s32.totalorder %s23, %s26
      %p32 = scmp.eq.s32.totalorder %s13, 0
      %p33 = por %p31, %p32
      %p34 = scmp.ne.s32.totalorder %s23, %s26
      %p35 = scmp.eq.s32.totalorder %s18, 1
      %p36 = por %p34, %p35
      %p37 = scmp.ne.s32.totalorder %s26, %s27
      %p38 = scmp.eq.s32.totalorder %s18, 0
      %p39 = por %p37, %p38
      %p40 = scmp.ne.s32.totalorder %s26, %s27
      %p41 = scmp.eq.s32.totalorder %s19, 1
      %p42 = por %p40, %p41
      %p44 = scmp.ne.s32.totalorder %s27, %s43
      %p45 = scmp.eq.s32.totalorder %s19, 0
      %p46 = por %p44, %p45
      %s48 = sadd.s32 %s47, 1
      %p51 = scmp.eq.s32.totalorder %s13, 1
      %p52 = scmp.ne.s32.totalorder %s47, %s49
      %p53 = scmp.eq.s32.totalorder %s13, 0
      %p54 = por %p52, %p53
      %p55 = scmp.ne.s32.totalorder %s47, %s49
      %p56 = scmp.eq.s32.totalorder %s18, 1
      %p57 = por %p55, %p56
      %p58 = scmp.ne.s32.totalorder %s49, %s50
      %p59 = scmp.eq.s32.totalorder %s18, 0
      %p60 = por %p58, %p59
      %p61 = scmp.ne.s32.totalorder %s49, %s50
      %p62 = scmp.eq.s32.totalorder %s19, 1
      %p63 = por %p61, %p62
      %p65 = scmp.ne.s32.totalorder %s50, %s64
      %p66 = scmp.eq.s32.totalorder %s19, 0
      %p67 = por %p65, %p66
      %s69 = sadd.s32 %s68, 1
      %p72 = scmp.eq.s32.totalorder %s13, 1
      %p73 = scmp.ne.s32.totalorder %s68, %s70
      %p74 = scmp.eq.s32.totalorder %s13, 0
      %p75 = por %p73, %p74
      %p76 = scmp.ne.s32.totalorder %s68, %s70
      %p77 = scmp.eq.s32.totalorder %s18, 1
      %p78 = por %p76, %p77
      %p79 = scmp.ne.s32.totalorder %s70, %s71
      %p80 = scmp.eq.s32.totalorder %s18, 0
      %p81 = por %p79, %p80
      %p82 = scmp.ne.s32.totalorder %s70, %s71
      %p83 = scmp.eq.s32.totalorder %s19, 1
      %p84 = por %p82, %p83
      %p86 = scmp.ne.s32.totalorder %s71, %s85
      %p87 = scmp.eq.s32.totalorder %s19, 0
      %p88 = por %p86, %p87
      %s90 = sadd.s32 %s89, 1
      %p93 = scmp.eq.s32.totalorder %s13, 1
      %p94 = scmp.ne.s32.totalorder %s89, %s91
      %p95 = scmp.eq.s32.totalorder %s13, 0
      %p96 = por %p94, %p95
      %p97 = scmp.ne.s32.totalorder %s89, %s91
      %p98 = scmp.eq.s32.totalorder %s18, 1
      %p99 = por %p97, %p98
      %p100 = scmp.ne.s32.totalorder %s91, %s92
      %p101 = scmp.eq.s32.totalorder %s18, 0
      %p102 = por %p100, %p101
      %p103 = scmp.ne.s32.totalorder %s91, %s92
      %p104 = scmp.eq.s32.totalorder %s19, 1
      %p105 = por %p103, %p104
      %p107 = scmp.ne.s32.totalorder %s92, %s106
      %p108 = scmp.eq.s32.totalorder %s19, 0
      %p109 = por %p107, %p108
      %s111 = sadd.s32 %s110, 1
      %p114 = scmp.eq.s32.totalorder %s13, 1
      %p115 = scmp.ne.s32.totalorder %s110, %s112
      %p116 = scmp.eq.s32.totalorder %s13, 0
      %p117 = por %p115, %p116
      %p118 = scmp.ne.s32.totalorder %s110, %s112
      %p119 = scmp.eq.s32.totalorder %s18, 1
      %p120 = por %p118, %p119
      %p121 = scmp.ne.s32.totalorder %s112, %s113
      %p122 = scmp.eq.s32.totalorder %s18, 0
      %p123 = por %p121, %p122
      %p124 = scmp.ne.s32.totalorder %s112, %s113
      %p125 = scmp.eq.s32.totalorder %s19, 1
      %p126 = por %p124, %p125
      %p128 = scmp.ne.s32.totalorder %s113, %s127
      %p129 = scmp.eq.s32.totalorder %s19, 0
      %p130 = por %p128, %p129
      %s132 = sadd.s32 %s131, 1
      %p135 = scmp.eq.s32.totalorder %s13, 1
      %p136 = scmp.ne.s32.totalorder %s131, %s133
      %p137 = scmp.eq.s32.totalorder %s13, 0
      %p138 = por %p136, %p137
      %p139 = scmp.ne.s32.totalorder %s131, %s133
      %p140 = scmp.eq.s32.totalorder %s18, 1
      %p141 = por %p139, %p140
      %p142 = scmp.ne.s32.totalorder %s133, %s134
      %p143 = scmp.eq.s32.totalorder %s18, 0
      %p144 = por %p142, %p143
      %p145 = scmp.ne.s32.totalorder %s133, %s134
      %p146 = scmp.eq.s32.totalorder %s19, 1
      %p147 = por %p145, %p146
      %p149 = scmp.ne.s32.totalorder %s134, %s148
      %p150 = scmp.eq.s32.totalorder %s19, 0
      %p151 = por %p149, %p150
      %s153 = sadd.s32 %s152, 1
      %p156 = scmp.eq.s32.totalorder %s13, 1
      %p157 = scmp.ne.s32.totalorder %s152, %s154
      %p158 = scmp.eq.s32.totalorder %s13, 0
      %p159 = por %p157, %p158
      %p160 = scmp.ne.s32.totalorder %s152, %s154
      %p161 = scmp.eq.s32.totalorder %s18, 1
      %p162 = por %p160, %p161
      %p163 = scmp.ne.s32.totalorder %s154, %s155
      %p164 = scmp.eq.s32.totalorder %s18, 0
      %p165 = por %p163, %p164
      %p166 = scmp.ne.s32.totalorder %s154, %s155
      %p167 = scmp.eq.s32.totalorder %s19, 1
      %p168 = por %p166, %p167
      %p170 = scmp.ne.s32.totalorder %s155, %s169
      %p171 = scmp.eq.s32.totalorder %s19, 0
      %p172 = por %p170, %p171
      %s173 = ssub.s32 %s13, %s20
      %p174 = scmp.eq.s32.totalorder %s173, 0
      %s176 = sadd.s32 %s175, 1
      %s177 = scalar_select %p174, %s175, %s176
      %p180 = pneg %p174
      %p181 = scmp.eq.s32.totalorder %s13, 1
      %p182 = por %p180, %p181
      %p183 = scmp.ne.s32.totalorder %s175, %s178
      %p184 = scmp.eq.s32.totalorder %s13, 0
      %p185 = por %p183, %p184
      %p186 = scmp.ne.s32.totalorder %s175, %s178
      %p187 = scmp.eq.s32.totalorder %s18, 1
      %p188 = por %p186, %p187
      %p189 = scmp.ne.s32.totalorder %s178, %s179
      %p190 = scmp.eq.s32.totalorder %s18, 0
      %p191 = por %p189, %p190
      %p192 = scmp.ne.s32.totalorder %s178, %s179
      %p193 = scmp.eq.s32.totalorder %s19, 1
      %p194 = por %p192, %p193
      %p196 = scmp.ne.s32.totalorder %s179, %s195
      %p197 = scmp.eq.s32.totalorder %s19, 0
      %p198 = por %p196, %p197
      %p199 = scmp.le.s32.totalorder 1, %s13
      %p200 = scmp.lt.s32.totalorder %s13, 3
      %p201 = pnand %p199, %p200
      %p202 = pneg %p201
      // Predicated region
      $region9: #{tpu_custom_call.1} parent=5 // pred_check
        _
      $region10: #{tpu_custom_call.1} parent=5 // pred_check_branch
        %204 = sbr.rel (%p201) target = $region12
      $region11: #{tpu_custom_call.1} parent=5 // pred_region
        %s205 = ssub.s32 %s13, 1
        // Predicated region
        $region13: #{tpu_custom_call.1} parent=11 // pred_check
          %p206 = pneg %p60
        $region14: #{tpu_custom_call.1} parent=11 // pred_check_branch
          %208 = sbr.rel (%p206) target = $region16
        $region15: #{tpu_custom_call.1} parent=11 // pred_region
          _
        $region16: #{tpu_custom_call.1} parent=11 // pred_fallthru
          _
        // Predicated region
        $region17: #{tpu_custom_call.1} parent=11 // pred_check
          %p209 = pneg %p81
        $region18: #{tpu_custom_call.1} parent=11 // pred_check_branch
          %211 = sbr.rel (%p209) target = $region20
        $region19: #{tpu_custom_call.1} parent=11 // pred_region
          _
        $region20: #{tpu_custom_call.1} parent=11 // pred_fallthru
          _
        // Predicated region
        $region21: #{tpu_custom_call.1} parent=11 // pred_check
          %p212 = pneg %p102
        $region22: #{tpu_custom_call.1} parent=11 // pred_check_branch
          %214 = sbr.rel (%p212) target = $region24
        $region23: #{tpu_custom_call.1} parent=11 // pred_region
          _
        $region24: #{tpu_custom_call.1} parent=11 // pred_fallthru
          _
        // Predicated region
        $region25: #{tpu_custom_call.1} parent=11 // pred_check
          %p215 = pneg %p123
        $region26: #{tpu_custom_call.1} parent=11 // pred_check_branch
          %217 = sbr.rel (%p215) target = $region28
        $region27: #{tpu_custom_call.1} parent=11 // pred_region
          _
        $region28: #{tpu_custom_call.1} parent=11 // pred_fallthru
          _
        // Predicated region
        $region29: #{tpu_custom_call.1} parent=11 // pred_check
          %p218 = pneg %p144
        $region30: #{tpu_custom_call.1} parent=11 // pred_check_branch
          %220 = sbr.rel (%p218) target = $region32
        $region31: #{tpu_custom_call.1} parent=11 // pred_region
          _
        $region32: #{tpu_custom_call.1} parent=11 // pred_fallthru
          _
        // Predicated region
        $region33: #{tpu_custom_call.1} parent=11 // pred_check
          %p221 = pneg %p165
        $region34: #{tpu_custom_call.1} parent=11 // pred_check_branch
          %223 = sbr.rel (%p221) target = $region36
        $region35: #{tpu_custom_call.1} parent=11 // pred_region
          _
        $region36: #{tpu_custom_call.1} parent=11 // pred_fallthru
          _
      $region12: #{tpu_custom_call.1} parent=5 // pred_fallthru
        _
      %p224 = scmp.lt.s32.totalorder %s13, 2
      // Predicated region
      $region37: #{tpu_custom_call.1} parent=5 // pred_check
        %p225 = pneg %p224
      $region38: #{tpu_custom_call.1} parent=5 // pred_check_branch
        %227 = sbr.rel (%p225) target = $region40
      $region39: #{tpu_custom_call.1} parent=5 // pred_region
        // Predicated region
        $region41: #{tpu_custom_call.1} parent=39 // pred_check
          %p228 = pneg %p33
        $region42: #{tpu_custom_call.1} parent=39 // pred_check_branch
          %230 = sbr.rel (%p228) target = $region44
        $region43: #{tpu_custom_call.1} parent=39 // pred_region
          %s231 = smul.u32 3, %s13
          %s232 = ssub.s32 5, %s231
          %p233 = scmp.lt.s32.totalorder %s232, 3
          %s234 = scalar_select %p233, %s232, 3
          %s235 = smul.u32 8, %s234
          %p236 = scmp.lt.s32.totalorder %s231, 4
          %s237 = scalar_select %p236, %s231, 4
          %s238 = smul.addr %s237, 8
          %s239 = scalar_lea.vmem %s0, %s238
          %s240 = smul.u32 3, %s13
          %s241 = ssub.s32 5, %s240
          %p242 = scmp.lt.s32.totalorder %s241, 3
          %s243 = scalar_select %p242, %s241, 3
          %s244 = smul.u32 8, %s243
        $region44: #{tpu_custom_call.1} parent=39 // pred_fallthru
          _
      $region40: #{tpu_custom_call.1} parent=5 // pred_fallthru
        _
      %p245 = scmp.le.s32.totalorder 1, %s13
      %p246 = scmp.lt.s32.totalorder %s13, 3
      %p247 = pnand %p245, %p246
      %p248 = pneg %p247
      // Predicated region
      $region45: #{tpu_custom_call.1} parent=5 // pred_check
        _
      $region46: #{tpu_custom_call.1} parent=5 // pred_check_branch
        %250 = sbr.rel (%p247) target = $region48
      $region47: #{tpu_custom_call.1} parent=5 // pred_region
        %s251 = ssub.s32 %s13, 1
        %s252 = smul.u32 3, %s18
        %s253 = ssub.s32 5, %s252
        %p254 = scmp.lt.s32.totalorder %s253, 3
        %s255 = scalar_select %p254, %s253, 3
        %s256 = smul.u32 8, %s255
        %p257 = scmp.lt.s32.totalorder %s252, 4
        %s258 = scalar_select %p257, %s252, 4
        %s259 = smul.addr %s258, 8
        %s260 = scalar_lea.vmem %s0, %s259
        %p261 = pneg %p39
        %p262 = pneg %p36
        %p263 = pneg %p60
        %p264 = pneg %p57
        %p265 = pneg %p81
        %p266 = pneg %p78
        %p267 = pneg %p102
        %p268 = pneg %p99
        %p269 = pneg %p123
        %p270 = pneg %p120
        %p271 = pneg %p144
        %p272 = pneg %p141
        %p273 = pneg %p165
        %p274 = pneg %p162
        %p275 = pneg %p191
        %p276 = pneg %p188
        %s277 = sand.u32 %s178, 1
        %s278 = sand.u32 %s178, 1
        %s279 = smul.addr %s278, 24
        %s280 = scalar_lea.vmem [#allocation2], %s279
        %s281 = smul.u32 3, %s18
        %s282 = ssub.s32 5, %s281
        %p283 = scmp.lt.s32.totalorder %s282, 3
        %s284 = scalar_select %p283, %s282, 3
        %s285 = smul.u32 8, %s284
        %p286 = scmp.lt.s32.totalorder %s281, 4
        %s287 = scalar_select %p286, %s281, 4
        %s288 = smul.addr %s287, 8
        %s289 = scalar_lea.vmem %s0, %s288
        %s290 = smul.u32 3, %s18
        %s291 = ssub.s32 5, %s290
        %p292 = scmp.lt.s32.totalorder %s291, 3
        %s293 = scalar_select %p292, %s291, 3
        %s294 = smul.u32 8, %s293
        %s295 = smul.u32 3, %s18
        %s296 = ssub.s32 5, %s295
        %p297 = scmp.lt.s32.totalorder %s296, 3
        %s298 = scalar_select %p297, %s296, 3
        %s299 = smul.u32 8, %s298
        %v301 = vld [vmem:[%s289] sm:$0xff]
        %v302 = vld [vmem:[%s289 + $0x8] sm:$0xff]
        %v303 = vld [vmem:[%s289 + $0x10] sm:$0xff]
        %v304 = vpack.c.bf16 %v302, %v301
        %v305 = vpack.c.bf16 %v303, %v303
        %v306 = vld [vmem:[%s1] sm:$0xf]
        %v307 = vld [vmem:[%s1 + $0x4] sm:$0xf]
        %v308 = vld [vmem:[%s2] sm:$0x1]
        %v310 = vperm.slane %v308, 0
        %v314 = vunpack.c.l.b16 %v306
        %v315 = vunpack.c.l.b16 %v307
        %v316 = vpack.c.b16 %v315, %v314
        %vm318 = vcmask 130048
        %v320 = vsel %vm318, %v304, 0
        %v323 = vsel %vm318, %v305, 0
        %325 = vmatpush.bf16.msra.mxu0 0
        %326 = vmatpush.bf16.msra.mxu0 0
        %327 = vmatpush.bf16.msra.mxu0 0
        %328 = vmatpush.bf16.msra.mxu0 0
        %329 = vmatpush.bf16.msra.mxu0 0
        %330 = vmatpush.bf16.msra.mxu0 0
        %331 = vmatpush.bf16.msra.mxu0 0
        %332 = vmatpush.bf16.msra.mxu0 %v316
        %333 = vmatmul.bf16.gmra.mxu0 %v320
        %v334 = vpop.f32.mrf.mxu0
        %v335 = vadd.f32 %v310, %v334
        %v336 = vpop.f32.mrf.mxu0
        %v337 = vadd.f32 %v310, %v336
        %338 = vmatmul.bf16.gmra.mxu0 %v323
        %v339 = vpop.f32.mrf.mxu0
        %v340 = vadd.f32 %v310, %v339
        %v341 = vpop.f32.mrf.mxu0
        %342 = vdwg.mxu0
        %v343 = vmax.f32 %v335, 0.0
        %v344 = vmax.f32 %v337, 0.0
        %v345 = vmax.f32 %v340, 0.0
        %v346 = vpack.c.bf16 %v344, %v343
        %v347 = vpack.c.bf16 %v345, %v345
        %v348 = vld [vmem:[%s3] sm:$0xf]
        %v349 = vld [vmem:[%s3 + $0x4] sm:$0xf]
        %v350 = vld [vmem:[%s3 + $0x8] sm:$0xf]
        %v351 = vld [vmem:[%s3 + $0xc] sm:$0xf]
        %v352 = vld [vmem:[%s3 + $0x10] sm:$0xf]
        %v353 = vld [vmem:[%s3 + $0x14] sm:$0xf]
        %v354 = vld [vmem:[%s3 + $0x18] sm:$0xf]
        %v355 = vld [vmem:[%s3 + $0x1c] sm:$0xf]
        %v356 = vld [vmem:[%s4] sm:$0x1]
        %v358 = vperm.slane %v356, 0
        %v368 = vunpack.c.l.b16 %v348
        %v369 = vunpack.c.l.b16 %v349
        %v370 = vunpack.c.l.b16 %v350
        %v371 = vunpack.c.l.b16 %v351
        %v372 = vunpack.c.l.b16 %v352
        %v373 = vunpack.c.l.b16 %v353
        %v374 = vunpack.c.l.b16 %v354
        %v375 = vunpack.c.l.b16 %v355
        %v376 = vpack.c.b16 %v369, %v368
        %v377 = vpack.c.b16 %v371, %v370
        %v378 = vpack.c.b16 %v373, %v372
        %v379 = vpack.c.b16 %v375, %v374
        %vm384 = vcmask 523264
        %v386 = vsel %vm384, %v346, 0
        %v389 = vsel %vm384, %v347, 0
        %391 = vmatpush.bf16.msra.mxu0 0
        %392 = vmatpush.bf16.msra.mxu0 0
        %393 = vmatpush.bf16.msra.mxu0 0
        %394 = vmatpush.bf16.msra.mxu0 0
        %395 = vmatpush.bf16.msra.mxu0 %v379
        %396 = vmatpush.bf16.msra.mxu0 %v378
        %397 = vmatpush.bf16.msra.mxu0 %v377
        %398 = vmatpush.bf16.msra.mxu0 %v376
        %399 = vmatmul.bf16.gmra.mxu0 %v386
        %v400 = vpop.f32.mrf.mxu0
        %v401 = vadd.f32 %v358, %v400
        %v402 = vpop.f32.mrf.mxu0
        %v403 = vadd.f32 %v358, %v402
        %404 = vmatmul.bf16.gmra.mxu0 %v389
        %v405 = vpop.f32.mrf.mxu0
        %v406 = vadd.f32 %v358, %v405
        %v407 = vpop.f32.mrf.mxu0
        %408 = vdwg.mxu0
        %v409 = vmax.f32 %v401, 0.0
        %v410 = vmax.f32 %v403, 0.0
        %v411 = vmax.f32 %v406, 0.0
        %v412 = vpack.c.bf16 %v410, %v409
        %v413 = vpack.c.bf16 %v411, %v411
        %v414 = vld [vmem:[%s5] sm:$0xf]
        %v415 = vld [vmem:[%s5 + $0x4] sm:$0xf]
        %v416 = vld [vmem:[%s5 + $0x8] sm:$0xf]
        %v417 = vld [vmem:[%s5 + $0xc] sm:$0xf]
        %v418 = vld [vmem:[%s6] sm:$0x1]
        %v420 = vperm.slane %v418, 0
        %v426 = vunpack.c.l.b16 %v414
        %v427 = vunpack.c.l.b16 %v415
        %v428 = vunpack.c.l.b16 %v416
        %v429 = vunpack.c.l.b16 %v417
        %v430 = vpack.c.b16 %v427, %v426
        %v431 = vpack.c.b16 %v429, %v428
        %vm434 = vcmask 261120
        %v436 = vsel %vm434, %v412, 0
        %v439 = vsel %vm434, %v413, 0
        %441 = vmatpush.bf16.msra.mxu0 0
        %442 = vmatpush.bf16.msra.mxu0 0
        %443 = vmatpush.bf16.msra.mxu0 0
        %444 = vmatpush.bf16.msra.mxu0 0
        %445 = vmatpush.bf16.msra.mxu0 0
        %446 = vmatpush.bf16.msra.mxu0 0
        %447 = vmatpush.bf16.msra.mxu0 %v431
        %448 = vmatpush.bf16.msra.mxu0 %v430
        %449 = vmatmul.bf16.gmra.mxu0 %v436
        %v450 = vpop.f32.mrf.mxu0
        %v451 = vadd.f32 %v420, %v450
        %v452 = vpop.f32.mrf.mxu0
        %v453 = vadd.f32 %v420, %v452
        %454 = vmatmul.bf16.gmra.mxu0 %v439
        %v455 = vpop.f32.mrf.mxu0
        %v456 = vadd.f32 %v420, %v455
        %v457 = vpop.f32.mrf.mxu0
        %458 = vdwg.mxu0
        %vm459 = vcmask 31744
        %460 = vst.msk [vmem:[%s280] sm:$0xff] %vm459, %v451
        %461 = vst.msk [vmem:[%s280 + $0x8] sm:$0xff] %vm459, %v453
        %462 = vst.msk [vmem:[%s280 + $0x10] sm:$0xff] %vm459, %v456
        %s463 = sand.u32 %s178, 1
        %s464 = sand.u32 %s178, 1
        %s465 = smul.addr %s464, 24
        %s466 = scalar_lea.vmem [#allocation2], %s465
        // Predicated region
        $region49: #{tpu_custom_call.1} parent=47 // pred_check
          %p467 = pneg %p188
        $region50: #{tpu_custom_call.1} parent=47 // pred_check_branch
          %469 = sbr.rel (%p467) target = $region52
        $region51: #{tpu_custom_call.1} parent=47 // pred_region
          %s470 = smul.u32 3, %s18
          %s471 = ssub.s32 5, %s470
          %p472 = scmp.lt.s32.totalorder %s471, 3
          %s473 = scalar_select %p472, %s471, 3
          %s474 = smul.u32 8, %s473
          %p475 = scmp.ne.s32.totalorder 0, %s474
          %s476 = smul.addr %s470, 8
          %s477 = scalar_lea.vmem %s7, %s476
          // Predicated region
          $region53: #{tpu_custom_call.1} parent=51 // pred_check
            %p478 = pneg %p475
          $region54: #{tpu_custom_call.1} parent=51 // pred_check_branch
            %480 = sbr.rel (%p478) target = $region56
          $region55: #{tpu_custom_call.1} parent=51 // pred_region
            // Predicated region
            $region57: #{tpu_custom_call.1} parent=55 // pred_check
              _
            $region58: #{tpu_custom_call.1} parent=55 // pred_check_branch
              %482 = sbr.rel (0) target = $region60
            $region59: #{tpu_custom_call.1} parent=55 // pred_region
              // Predicated region
              $region79: #{tpu_custom_call.1} parent=59 // pred_check
                _
              $region80: #{tpu_custom_call.1} parent=59 // pred_check_branch
                %537 = sbr.rel (0) target = $region82
              $region81: #{tpu_custom_call.1} parent=59 // pred_region
                %s538 = sdiv.u32.pop %s473, 3
                %s539 = srem.u32.pop %s473, 3
                // While loop
                $region83: #{tpu_custom_call.1} parent=81 // loop_pre_header
                  _
                $region84: #{tpu_custom_call.1} parent=81 // loop_header
                  %s541 = sphi 0, %s543
                  %p542 = scmp.ge.s32.totalorder %s541, %s538
                  %s546 = sphi 0, %s557
                  %s547 = sphi %s466, %s560
                  %s548 = sphi %s477, %s561
                $region85: #{tpu_custom_call.1} parent=81 // loop_header_branch
                  %545 = sbr.rel (%p542) target = $region89
                $region86: #{tpu_custom_call.1} parent=81 // loop_body
                  %v549 = vld [vmem:[%s547] sm:$0xff]
                  %550 = vst [vmem:[%s548] sm:$0xff] %v549
                  %v551 = vld [vmem:[%s547 + $0x8] sm:$0xff]
                  %552 = vst [vmem:[%s548 + $0x8] sm:$0xff] %v551
                  %v553 = vld [vmem:[%s547 + $0x10] sm:$0xff]
                  %554 = vst [vmem:[%s548 + $0x10] sm:$0xff] %v553
                  %s555 = sadd.s32 1, %s546
                  %p556 = scmp.ge.s32.totalorder %s555, %s538
                  %s557 = scalar_select %p556, 0, %s555
                  %s558 = smul.u32 %s557, 24
                  %s559 = smul.u32 %s557, 24
                  %s560 = scalar_lea.vmem %s466, %s558 [#allocation2]
                  %s561 = scalar_lea.vmem %s477, %s559
                $region87: #{tpu_custom_call.1} parent=81 // loop_footer
                  %s543 = sadd.s32 %s541, 1
                $region88: #{tpu_custom_call.1} parent=81 // loop_footer_branch
                  %540 = sbr.rel target = $region84
                $region89: #{tpu_custom_call.1} parent=81 // loop_exit
                  _
                %s562 = sdiv.u32.pop %s473, 3
                %s563 = srem.u32.pop %s473, 3
                %s564 = smul.u32 %s562, 3
                %s565 = smul.u32 8, %s564
                %s566 = scalar_lea.vmem %s466, %s565 [#allocation2]
                %s567 = smul.u32 8, %s564
                %s568 = scalar_lea.vmem %s477, %s567
                // While loop
                $region90: #{tpu_custom_call.1} parent=81 // loop_pre_header
                  _
                $region91: #{tpu_custom_call.1} parent=81 // loop_header
                  %s570 = sphi 0, %s572
                  %p571 = scmp.ge.s32.totalorder %s570, %s563
                  %s575 = sphi 0, %s582
                  %s576 = sphi %s566, %s585
                  %s577 = sphi %s568, %s586
                $region92: #{tpu_custom_call.1} parent=81 // loop_header_branch
                  %574 = sbr.rel (%p571) target = $region96
                $region93: #{tpu_custom_call.1} parent=81 // loop_body
                  %v578 = vld [vmem:[%s576] sm:$0xff]
                  %579 = vst [vmem:[%s577] sm:$0xff] %v578
                  %s580 = sadd.s32 1, %s575
                  %p581 = scmp.ge.s32.totalorder %s580, %s563
                  %s582 = scalar_select %p581, 0, %s580
                  %s583 = smul.u32 %s582, 8
                  %s584 = smul.u32 %s582, 8
                  %s585 = scalar_lea.vmem %s566, %s583 [#allocation2]
                  %s586 = scalar_lea.vmem %s568, %s584
                $region94: #{tpu_custom_call.1} parent=81 // loop_footer
                  %s572 = sadd.s32 %s570, 1
                $region95: #{tpu_custom_call.1} parent=81 // loop_footer_branch
                  %569 = sbr.rel target = $region91
                $region96: #{tpu_custom_call.1} parent=81 // loop_exit
                  _
              $region82: #{tpu_custom_call.1} parent=59 // pred_fallthru
                _
              // Predicated region
              $region97: #{tpu_custom_call.1} parent=59 // pred_check
                _
              $region98: #{tpu_custom_call.1} parent=59 // pred_check_branch
                %588 = sbr.rel target = $region100
              $region99: #{tpu_custom_call.1} parent=59 // pred_region
                _
              $region100: #{tpu_custom_call.1} parent=59 // pred_fallthru
                _
            $region60: #{tpu_custom_call.1} parent=55 // pred_fallthru
              _
            // Predicated region
            $region61: #{tpu_custom_call.1} parent=55 // pred_check
              _
            $region62: #{tpu_custom_call.1} parent=55 // pred_check_branch
              %484 = sbr.rel target = $region64
            $region63: #{tpu_custom_call.1} parent=55 // pred_region
              %s486 = ssub.s32 256, 1
              %s487 = sdiv.u32.pop %s473, 3
              %s488 = srem.u32.pop %s473, 3
              // While loop
              $region65: #{tpu_custom_call.1} parent=63 // loop_pre_header
                _
              $region66: #{tpu_custom_call.1} parent=63 // loop_header
                %s490 = sphi 0, %s492
                %p491 = scmp.ge.s32.totalorder %s490, %s487
                %s495 = sphi 0, %s506
                %s496 = sphi %s466, %s509
                %s497 = sphi %s477, %s510
              $region67: #{tpu_custom_call.1} parent=63 // loop_header_branch
                %494 = sbr.rel (%p491) target = $region71
              $region68: #{tpu_custom_call.1} parent=63 // loop_body
                %v498 = vld [vmem:[%s496] sm:%s486]
                %499 = vst [vmem:[%s497] sm:%s486] %v498
                %v500 = vld [vmem:[%s496 + $0x8] sm:%s486]
                %501 = vst [vmem:[%s497 + $0x8] sm:%s486] %v500
                %v502 = vld [vmem:[%s496 + $0x10] sm:%s486]
                %503 = vst [vmem:[%s497 + $0x10] sm:%s486] %v502
                %s504 = sadd.s32 1, %s495
                %p505 = scmp.ge.s32.totalorder %s504, %s487
                %s506 = scalar_select %p505, 0, %s504
                %s507 = smul.u32 %s506, 24
                %s508 = smul.u32 %s506, 24
                %s509 = scalar_lea.vmem %s466, %s507 [#allocation2]
                %s510 = scalar_lea.vmem %s477, %s508
              $region69: #{tpu_custom_call.1} parent=63 // loop_footer
                %s492 = sadd.s32 %s490, 1
              $region70: #{tpu_custom_call.1} parent=63 // loop_footer_branch
                %489 = sbr.rel target = $region66
              $region71: #{tpu_custom_call.1} parent=63 // loop_exit
                _
              %s511 = sdiv.u32.pop %s473, 3
              %s512 = srem.u32.pop %s473, 3
              %s513 = smul.u32 %s511, 3
              %s514 = smul.u32 8, %s513
              %s515 = scalar_lea.vmem %s466, %s514 [#allocation2]
              %s516 = smul.u32 8, %s513
              %s517 = scalar_lea.vmem %s477, %s516
              // While loop
              $region72: #{tpu_custom_call.1} parent=63 // loop_pre_header
                _
              $region73: #{tpu_custom_call.1} parent=63 // loop_header
                %s519 = sphi 0, %s521
                %p520 = scmp.ge.s32.totalorder %s519, %s512
                %s524 = sphi 0, %s531
                %s525 = sphi %s515, %s534
                %s526 = sphi %s517, %s535
              $region74: #{tpu_custom_call.1} parent=63 // loop_header_branch
                %523 = sbr.rel (%p520) target = $region78
              $region75: #{tpu_custom_call.1} parent=63 // loop_body
                %v527 = vld [vmem:[%s525] sm:%s486]
                %528 = vst [vmem:[%s526] sm:%s486] %v527
                %s529 = sadd.s32 1, %s524
                %p530 = scmp.ge.s32.totalorder %s529, %s512
                %s531 = scalar_select %p530, 0, %s529
                %s532 = smul.u32 %s531, 8
                %s533 = smul.u32 %s531, 8
                %s534 = scalar_lea.vmem %s515, %s532 [#allocation2]
                %s535 = scalar_lea.vmem %s517, %s533
              $region76: #{tpu_custom_call.1} parent=63 // loop_footer
                %s521 = sadd.s32 %s519, 1
              $region77: #{tpu_custom_call.1} parent=63 // loop_footer_branch
                %518 = sbr.rel target = $region73
              $region78: #{tpu_custom_call.1} parent=63 // loop_exit
                _
            $region64: #{tpu_custom_call.1} parent=55 // pred_fallthru
              _
          $region56: #{tpu_custom_call.1} parent=51 // pred_fallthru
            _
          %589 = vnop
        $region52: #{tpu_custom_call.1} parent=47 // pred_fallthru
          _
      $region48: #{tpu_custom_call.1} parent=5 // pred_fallthru
        _
      %p590 = scmp.le.s32.totalorder 2, %s13
      // Predicated region
      $region101: #{tpu_custom_call.1} parent=5 // pred_check
        %p591 = pneg %p590
      $region102: #{tpu_custom_call.1} parent=5 // pred_check_branch
        %593 = sbr.rel (%p591) target = $region104
      $region103: #{tpu_custom_call.1} parent=5 // pred_region
        %s594 = ssub.s32 %s13, 2
        // Predicated region
        $region105: #{tpu_custom_call.1} parent=103 // pred_check
          %p595 = pneg %p194
        $region106: #{tpu_custom_call.1} parent=103 // pred_check_branch
          %597 = sbr.rel (%p595) target = $region108
        $region107: #{tpu_custom_call.1} parent=103 // pred_region
          %s598 = sand.u32 %s179, 1
          %s599 = sand.u32 %s179, 1
          %s600 = smul.addr %s599, 24
          %s601 = scalar_lea.vmem [#allocation2], %s600
        $region108: #{tpu_custom_call.1} parent=103 // pred_fallthru
          _
      $region104: #{tpu_custom_call.1} parent=5 // pred_fallthru
        _
    $region6: #{tpu_custom_call.1} parent=1 // loop_footer
      %s17 = sadd.s32 1, %s13
    $region7: #{tpu_custom_call.1} parent=1 // loop_footer_branch
      %12 = sbr.rel target = $region3
    $region8: #{tpu_custom_call.1} parent=1 // loop_exit
      _

</llo_original>
